<compile_context>
chip_gen: v5e
topology: v5e:2x2
jax: 0.10.0
libtpu: 0.0.40
codegen_flags: <defaults>
</compile_context>

<pallas_src>
import functools

import jax
import jax.numpy as jnp
from jax import lax
from jax.experimental import pallas as pl
from jax.experimental.pallas import tpu as pltpu


def _round_up(x, m):
    return (x + m - 1) // m * m


def _largest_divisor_tile(dim, unit, cap):
    """Largest multiple of `unit` that divides `dim` and is <= cap."""
    cap = min(cap, dim)
    best = unit
    t = unit
    while t <= cap:
        if dim % t == 0:
            best = t
        t += unit
    return best


def _dropout(y, seed_u32, row_off, col_off, dropout_p):
    """Tiling-invariant dropout mask from a 32-bit mix of (seed, row, col)."""
    tm, tn = y.shape
    row = (lax.broadcasted_iota(jnp.int32, (tm, tn), 0) + row_off).astype(jnp.uint32)
    col = (lax.broadcasted_iota(jnp.int32, (tm, tn), 1) + col_off).astype(jnp.uint32)
    z = seed_u32 + row * jnp.uint32(0x9E3779B9) + col * jnp.uint32(0x85EBCA6B)
    z = z ^ (z >> 16)
    z = z * jnp.uint32(0x7FEB352D)
    z = z ^ (z >> 15)
    z = z * jnp.uint32(0x846CA68B)
    z = z ^ (z >> 16)
    thresh = jnp.uint32(min(int(round(dropout_p * 4294967296.0)), 0xFFFFFFFF))
    keep = z >= thresh
    scale = jnp.float32(1.0 / (1.0 - dropout_p))
    return jnp.where(keep, y * scale, jnp.float32(0.0))


def _epilogue(y_f32, b_ref, seed_u32, row_off, col_off, *, dropout_p, training):
    y = y_f32 + b_ref[...].astype(jnp.float32)
    y = jnp.maximum(y, 0.0)  # ReLU
    if training and dropout_p > 0.0:
        if dropout_p >= 1.0:
            y = jnp.zeros_like(y)
        else:
            y = _dropout(y, seed_u32, row_off, col_off, dropout_p)
    return y


def _kernel_single_k(seed_ref, x_ref, w_ref, b_ref, o_ref, *, dropout_p, training):
    """Whole K in one tile: no accumulator scratch, fused epilogue."""
    i = pl.program_id(0)
    j = pl.program_id(1)
    seed = seed_ref[0].astype(jnp.uint32)
    tm, tn = o_ref.shape
    y = jnp.dot(x_ref[...], w_ref[...], preferred_element_type=jnp.float32)
    y = _epilogue(y, b_ref, seed, i * tm, j * tn,
                  dropout_p=dropout_p, training=training)
    o_ref[...] = y.astype(o_ref.dtype)


def _kernel_multi_k(seed_ref, x_ref, w_ref, b_ref, o_ref, acc_ref, *,
                    dropout_p, training):
    """K-reduction with f32 VMEM accumulator; epilogue applied once at k=last."""
    # Hoisted out of the pl.when bodies: program_id inside a cond branch has
    # no lowering under CPU interpret mode (the previous failure).
    i = pl.program_id(0)
    j = pl.program_id(1)
    k = pl.program_id(2)
    nk = pl.num_programs(2)
    seed = seed_ref[0].astype(jnp.uint32)
    tm, tn = o_ref.shape
    row_off = i * tm
    col_off = j * tn

    @pl.when(k == 0)
    def _init():
        acc_ref[...] = jnp.zeros_like(acc_ref)

    acc_ref[...] += jnp.dot(x_ref[...], w_ref[...],
                            preferred_element_type=jnp.float32)

    @pl.when(k == nk - 1)
    def _finalize():
        y = _epilogue(acc_ref[...], b_ref, seed, row_off, col_off,
                      dropout_p=dropout_p, training=training)
        o_ref[...] = y.astype(o_ref.dtype)


def linear_projection(x, w, b, *, dropout_p=0.1, training=False, seed=0,
                      mxu_dtype=None, max_tm=512, max_tn=512, max_tk=2048):
    """y = Dropout(ReLU(x @ w + b)).

    x: (B, D_in);  w: (D_in, D_out)  (transpose of torch Linear.weight);  b: (D_out,)
    """
    B, D_in = x.shape
    D_in_w, D_out = w.shape
    assert D_in_w == D_in

    if mxu_dtype is not None:
        x = x.astype(mxu_dtype)
        w = w.astype(mxu_dtype)
    in_itemsize = jnp.dtype(x.dtype).itemsize
    out_dtype = x.dtype
    out_itemsize = jnp.dtype(out_dtype).itemsize

    # Hardware-minimum padding only; tiles are divisors of the padded dims.
    m_unit = {4: 8, 2: 16, 1: 32}.get(in_itemsize, 8)
    Mp = _round_up(B, m_unit)
    Kp = _round_up(D_in, 128)
    Np = _round_up(D_out, 128)

    tm = _largest_divisor_tile(Mp, m_unit, max_tm)
    tn = _largest_divisor_tile(Np, 128, max_tn)
    tk = _largest_divisor_tile(Kp, 128, max_tk)

    # Keep >= 2 blocks on a "parallel" axis so v7x's second TensorCore has work.
    if Mp // tm == 1 and Np // tn == 1 and Np >= 256:
        tn = _largest_divisor_tile(Np, 128, Np // 2)

    n_i, n_j, n_k = Mp // tm, Np // tn, Kp // tk

    xp = x if (Mp, Kp) == (B, D_in) else jnp.pad(x, ((0, Mp - B), (0, Kp - D_in)))
    wp = w if (Kp, Np) == (D_in, D_out) else jnp.pad(w, ((0, Kp - D_in), (0, Np - D_out)))
    bp = (b if Np == D_out else jnp.pad(b, (0, Np - D_out))).reshape(1, Np)
    seed_arr = jnp.asarray([seed], dtype=jnp.int32)

    # Truthful traffic estimate: x re-read n_j times, w re-read n_i times.
    cost = pl.CostEstimate(
        flops=2 * Mp * Kp * Np,
        transcendentals=0,
        bytes_accessed=int(Mp * Kp * in_itemsize * n_j
                           + Kp * Np * in_itemsize * n_i
                           + Mp * Np * out_itemsize
                           + Np * 4 * n_i),
    )

    acc_bytes = tm * tn * 4 if n_k > 1 else 0
    vmem_needed = (2 * (tm * tk + tk * tn) * in_itemsize
                   + 2 * (tm * tn + tn) * out_itemsize
                   + acc_bytes)
    vmem_limit = int(min(max(32 * 1024 * 1024, int(1.5 * vmem_needed)),
                         48 * 1024 * 1024))

    if n_k == 1:
        kernel = functools.partial(_kernel_single_k,
                                   dropout_p=float(dropout_p),
                                   training=bool(training))
        grid_spec = pltpu.PrefetchScalarGridSpec(
            num_scalar_prefetch=1,
            grid=(n_i, n_j),
            in_specs=[
                pl.BlockSpec((tm, tk), lambda i, j, seed: (i, 0)),
                pl.BlockSpec((tk, tn), lambda i, j, seed: (0, j)),
                pl.BlockSpec((1, tn), lambda i, j, seed: (0, j)),
            ],
            out_specs=pl.BlockSpec((tm, tn), lambda i, j, seed: (i, j)),
        )
        dim_sem = ("parallel", "parallel")
    else:
        kernel = functools.partial(_kernel_multi_k,
                                   dropout_p=float(dropout_p),
                                   training=bool(training))
        grid_spec = pltpu.PrefetchScalarGridSpec(
            num_scalar_prefetch=1,
            grid=(n_i, n_j, n_k),
            in_specs=[
                pl.BlockSpec((tm, tk), lambda i, j, k, seed: (i, k)),
                pl.BlockSpec((tk, tn), lambda i, j, k, seed: (k, j)),
                pl.BlockSpec((1, tn), lambda i, j, k, seed: (0, j)),
            ],
            out_specs=pl.BlockSpec((tm, tn), lambda i, j, k, seed: (i, j)),
            scratch_shapes=[pltpu.VMEM((tm, tn), jnp.float32)],
        )
        dim_sem = ("parallel", "parallel", "arbitrary")

    out = pl.pallas_call(
        kernel,
        out_shape=jax.ShapeDtypeStruct((Mp, Np), out_dtype),
        grid_spec=grid_spec,
        compiler_params=pltpu.CompilerParams(
            dimension_semantics=dim_sem,
            vmem_limit_bytes=vmem_limit,
        ),
        cost_estimate=cost,
    )(seed_arr, xp, wp, bp)

    if (Mp, Np) != (B, D_out):
        out = out[:B, :D_out]
    return out


if __name__ == "__main__":
    key = jax.random.PRNGKey(0)
    k_x, k_w, k_b, k_x2, k_w2, k_b2 = jax.random.split(key, 6)

    # --- Small shape (single-K fast path) -----------------------------------
    batch, input_dim, output_dim, dropout_p = 8, 32, 64, 0.1
    x = jax.random.normal(k_x, (batch, input_dim), dtype=jnp.float32)
    bound = 1.0 / float(input_dim) ** 0.5
    w = jax.random.uniform(k_w, (input_dim, output_dim), jnp.float32, -bound, bound)
    b = jax.random.uniform(k_b, (output_dim,), jnp.float32, -bound, bound)

    out = jax.block_until_ready(
        linear_projection(x, w, b, dropout_p=dropout_p, training=False))
    ref = jnp.maximum(x @ w + b, 0.0)
    assert out.shape == (batch, output_dim)
    assert jnp.allclose(out, ref, atol=1e-5, rtol=1e-5)

    out_train = jax.block_until_ready(
        linear_projection(x, w, b, dropout_p=dropout_p, training=True, seed=123))
    assert out_train.shape == (batch, output_dim)
    scaled = ref / (1.0 - dropout_p)
    ok = (jnp.abs(out_train) <= 1e-6) | (jnp.abs(out_train - scaled) <= 1e-4)
    assert bool(jnp.all(ok))

    # --- Exercise the multi-K accumulator path (forced via small tk cap) ----
    b2_dim_in, b2_dim_out = 256, 128
    x2 = jax.random.normal(k_x2, (batch, b2_dim_in), dtype=jnp.float32)
    bound2 = 1.0 / float(b2_dim_in) ** 0.5
    w2 = jax.random.uniform(k_w2, (b2_dim_in, b2_dim_out), jnp.float32, -bound2, bound2)
    b2 = jax.random.uniform(k_b2, (b2_dim_out,), jnp.float32, -bound2, bound2)
    ref2 = jnp.maximum(x2 @ w2 + b2, 0.0)

    out2 = jax.block_until_ready(
        linear_projection(x2, w2, b2, dropout_p=dropout_p, training=False, max_tk=128))
    assert out2.shape == (batch, b2_dim_out)
    assert jnp.allclose(out2, ref2, atol=1e-5, rtol=1e-5)

    out2_train = jax.block_until_ready(
        linear_projection(x2, w2, b2, dropout_p=dropout_p, training=True,
                          seed=7, max_tk=128))
    scaled2 = ref2 / (1.0 - dropout_p)
    ok2 = (jnp.abs(out2_train) <= 1e-6) | (jnp.abs(out2_train - scaled2) <= 1e-4)
    assert bool(jnp.all(ok2))

    print("KERNEL_OK")
</pallas_src>

<mosaic_0001>
module attributes {stable_mosaic.version = 11 : i64} {
  func.func @_kernel_single_k(%arg0: i32, %arg1: i32, %arg2: memref<1xi32, #tpu.memory_space<smem>>, %arg3: memref<8x128xf32, #tpu.memory_space<vmem>>, %arg4: memref<128x128xf32, #tpu.memory_space<vmem>>, %arg5: memref<1x128xf32, #tpu.memory_space<vmem>>, %arg6: memref<8x128xf32, #tpu.memory_space<vmem>>) attributes {dimension_semantics = [#tpu.dimension_semantics<parallel>, #tpu.dimension_semantics<parallel>], iteration_bounds = array<i64: 1, 1>, scalar_prefetch = 1 : i64, scratch_operands = 0 : i64, tpu.core_type = #tpu.core_type<tc>, window_params = [{transform_indices = @transform_0, window_bounds = array<i64: 8, 128>}, {transform_indices = @transform_1, window_bounds = array<i64: 128, 128>}, {transform_indices = @transform_2, window_bounds = array<i64: 1, 128>}, {transform_indices = @transform_3, window_bounds = array<i64: 8, 128>}]} {
    %c0 = arith.constant 0 : index
    %c0_0 = arith.constant 0 : index
    %0 = vector.load %arg3[%c0, %c0_0] : memref<8x128xf32, #tpu.memory_space<vmem>>, vector<8x128xf32>
    %c0_1 = arith.constant 0 : index
    %c0_2 = arith.constant 0 : index
    %1 = vector.load %arg4[%c0_1, %c0_2] : memref<128x128xf32, #tpu.memory_space<vmem>>, vector<128x128xf32>
    %cst = arith.constant dense<0.000000e+00> : vector<8x128xf32>
    %2 = tpu.matmul %0, %1, %cst {dimension_numbers = #tpu.dot_dimension_numbers<[1], [0], [0], [1], [0, 0, 1, 1], [], []>} : vector<8x128xf32>, vector<128x128xf32>, vector<8x128xf32> -> vector<8x128xf32>
    %c0_3 = arith.constant 0 : index
    %c0_4 = arith.constant 0 : index
    %3 = vector.load %arg5[%c0_3, %c0_4] : memref<1x128xf32, #tpu.memory_space<vmem>>, vector<1x128xf32>
    %4 = vector.broadcast %3 : vector<1x128xf32> to vector<8x128xf32>
    %5 = arith.addf %2, %4 : vector<8x128xf32>
    %cst_5 = arith.constant 0.000000e+00 : f32
    %6 = vector.broadcast %cst_5 : f32 to vector<8x128xf32>
    %7 = arith.maximumf %5, %6 : vector<8x128xf32>
    %c0_6 = arith.constant 0 : index
    %c0_7 = arith.constant 0 : index
    %8 = vector.load %arg6[%c0_6, %c0_7] : memref<8x128xf32, #tpu.memory_space<vmem>>, vector<8x128xf32>
    tpu.vector_store %arg6[%c0_6, %c0_7], %7 {strides = array<i32>} : memref<8x128xf32, #tpu.memory_space<vmem>>, vector<8x128xf32>,
    return
  }
  func.func @transform_0(%arg0: i32, %arg1: i32, %arg2: memref<1xi32, #tpu.memory_space<smem>>) -> (i32, i32) {
    %c0_i32 = arith.constant 0 : i32
    %c0_i32_0 = arith.constant 0 : i32
    return %arg0, %c0_i32 : i32, i32
  }
  func.func @transform_1(%arg0: i32, %arg1: i32, %arg2: memref<1xi32, #tpu.memory_space<smem>>) -> (i32, i32) {
    %c0_i32 = arith.constant 0 : i32
    %c0_i32_0 = arith.constant 0 : i32
    return %c0_i32, %arg1 : i32, i32
  }
  func.func @transform_2(%arg0: i32, %arg1: i32, %arg2: memref<1xi32, #tpu.memory_space<smem>>) -> (i32, i32) {
    %c0_i32 = arith.constant 0 : i32
    %c0_i32_0 = arith.constant 0 : i32
    return %c0_i32, %arg1 : i32, i32
  }
  func.func @transform_3(%arg0: i32, %arg1: i32, %arg2: memref<1xi32, #tpu.memory_space<smem>>) -> (i32, i32) {
    %c0_i32 = arith.constant 0 : i32
    return %arg0, %arg1 : i32, i32
  }
}

</mosaic_0001>

<llo_original>
// kernel: tpu_custom_call.1
$region0: #{tpu_custom_call.1}
  #allocation0 [shape = 'u32[]', space=smem, size = 0x4, offset = 0x4, fixed_abs, tag = 'smem constant byte address 0x4 - core index']
  #allocation1 [shape = 'u32[72,128]{1,0:T(1,128)}', space=vmem, size = 0x9000, scoped, tag = 'internal scratch']
  #allocation2 [shape = 's32[1]{0}', space=sflag, size = 0x4, scoped, tag = 'scoped memory for tpu_custom_call.1']
  #allocation3 [shape = 's32[1]{0:T(128)S(6)}', space=smem, size = 0x200, scoped, tag = 'prefetched SMEM operand 0']
  %s0 = inlined_call_operand.<no memory space> [shape: s32[1], index: 0, kind: input, shape index: {}]
  %s1 = inlined_call_operand.hbm [shape: f32[8,128], index: 1, kind: input, shape index: {}]
  %s2 = inlined_call_operand.hbm [shape: f32[128,128], index: 2, kind: input, shape index: {}]
  %s3 = inlined_call_operand.vmem [shape: f32[1,128], index: 3, kind: input, shape index: {}]
  %s4 = inlined_call_operand.hbm [shape: f32[8,128], index: 4, kind: output, shape index: {}]
  %s5 = sld [smem:[#allocation0]]
  $region30: #{tpu_custom_call.1} parent=0
    _
  %s7 = ssub.s32 1, %s5
  %s8 = scalar_select 0, %s7, %s5
  %9 = sst [smem:[#allocation3]] %s0
  $region1: #{tpu_custom_call.1} parent=0
    #allocation4 [shape = 'u8[4096]{0}', space=vmem, size = 0x1000, scoped, tag = 'input window, operand 1, single buffered']
    #allocation5 [shape = 's32[1]{0}', space=sflag, size = 0x4, scoped, tag = 'scoped memory for tpu_custom_call.1']
    #allocation6 [shape = 's32[1]{0}', space=sflag, size = 0x4, scoped, tag = 'scoped memory for tpu_custom_call.1']
    #allocation7 [shape = 'u8[65536]{0}', space=vmem, size = 0x10000, scoped, tag = 'input window, operand 2, single buffered']
    #allocation8 [shape = 's32[1]{0}', space=sflag, size = 0x4, scoped, tag = 'scoped memory for tpu_custom_call.1']
    #allocation9 [shape = 'u8[4096]{0}', space=vmem, size = 0x1000, scoped, tag = 'output window, operand 0, single buffered']
    %10 = vsyncpa [#allocation5], 0
    %11 = vsyncpa [#allocation8], 0
    %12 = vsyncpa [#allocation6], 0
    // Predicated region
    $region2: #{tpu_custom_call.1} parent=1 // pred_check
      _
    $region3: #{tpu_custom_call.1} parent=1 // pred_check_branch
      %14 = sbr.rel (0) target = $region5
    $region4: #{tpu_custom_call.1} parent=1 // pred_region
      %16 = vsyncadd [#allocation5], 0
      %s18 = sshll.u32 %s1, 4
      %s19 = int_to_ptr.hbm [resolvable:$true] %s18
      %s20 = sshll.u32 [#allocation4], 4
      %s21 = int_to_ptr.vmem [resolvable:$true] %s20
      %23 = dma.hbm_to_vmem [thread:$0]  %s19, 128, %s21, [#allocation5]
    $region5: #{tpu_custom_call.1} parent=1 // pred_fallthru
      _
    // Predicated region
    $region6: #{tpu_custom_call.1} parent=1 // pred_check
      _
    $region7: #{tpu_custom_call.1} parent=1 // pred_check_branch
      %25 = sbr.rel (0) target = $region9
    $region8: #{tpu_custom_call.1} parent=1 // pred_region
      %27 = vsyncadd [#allocation8], 0
      %s28 = sshll.u32 %s2, 4
      %s29 = int_to_ptr.hbm [resolvable:$true] %s28
      %s30 = sshll.u32 [#allocation7], 4
      %s31 = int_to_ptr.vmem [resolvable:$true] %s30
      %36 = dma.hbm_to_vmem [thread:$0]  %s29, 2048, %s31, [#allocation8], 128, 128, 8
    $region9: #{tpu_custom_call.1} parent=1 // pred_fallthru
      _
    // Predicated region
    $region10: #{tpu_custom_call.1} parent=1 // pred_check
      _
    $region11: #{tpu_custom_call.1} parent=1 // pred_check_branch
      %38 = sbr.rel (0) target = $region13
    $region12: #{tpu_custom_call.1} parent=1 // pred_region
      _
    $region13: #{tpu_custom_call.1} parent=1 // pred_fallthru
      _
    // Predicated region
    $region14: #{tpu_custom_call.1} parent=1 // pred_check
      _
    $region15: #{tpu_custom_call.1} parent=1 // pred_check_branch
      %40 = sbr.rel (0) target = $region17
    $region16: #{tpu_custom_call.1} parent=1 // pred_region
      %42 = dma.done [#allocation5], 128
    $region17: #{tpu_custom_call.1} parent=1 // pred_fallthru
      _
    // Predicated region
    $region18: #{tpu_custom_call.1} parent=1 // pred_check
      _
    $region19: #{tpu_custom_call.1} parent=1 // pred_check_branch
      %44 = sbr.rel (0) target = $region21
    $region20: #{tpu_custom_call.1} parent=1 // pred_region
      %46 = dma.done [#allocation8], 2048
    $region21: #{tpu_custom_call.1} parent=1 // pred_fallthru
      _
    %v47 = vld [vmem:[#allocation4] sm:$0xff]
    %v48 = vld [vmem:[#allocation7] sm:$0xff]
    %v49 = vld [vmem:[#allocation7 + $0x8] sm:$0xff]
    %v50 = vld [vmem:[#allocation7 + $0x10] sm:$0xff]
    %v51 = vld [vmem:[#allocation7 + $0x18] sm:$0xff]
    %v52 = vld [vmem:[#allocation7 + $0x20] sm:$0xff]
    %v53 = vld [vmem:[#allocation7 + $0x28] sm:$0xff]
    %v54 = vld [vmem:[#allocation7 + $0x30] sm:$0xff]
    %v55 = vld [vmem:[#allocation7 + $0x38] sm:$0xff]
    %v56 = vld [vmem:[#allocation7 + $0x40] sm:$0xff]
    %v57 = vld [vmem:[#allocation7 + $0x48] sm:$0xff]
    %v58 = vld [vmem:[#allocation7 + $0x50] sm:$0xff]
    %v59 = vld [vmem:[#allocation7 + $0x58] sm:$0xff]
    %v60 = vld [vmem:[#allocation7 + $0x60] sm:$0xff]
    %v61 = vld [vmem:[#allocation7 + $0x68] sm:$0xff]
    %v62 = vld [vmem:[#allocation7 + $0x70] sm:$0xff]
    %v63 = vld [vmem:[#allocation7 + $0x78] sm:$0xff]
    %v64 = vld [vmem:[%s3] sm:$0x1]
    %v66 = vperm.slane %v64, 0
    %68 = vmatpush.msra.mxu0 %v63
    %69 = vmatpush.msra.mxu0 %v62
    %70 = vmatpush.msra.mxu0 %v61
    %71 = vmatpush.msra.mxu0 %v60
    %72 = vmatpush.msra.mxu0 %v59
    %73 = vmatpush.msra.mxu0 %v58
    %74 = vmatpush.msra.mxu0 %v57
    %75 = vmatpush.msra.mxu0 %v56
    %76 = vmatpush.msra.mxu0 %v55
    %77 = vmatpush.msra.mxu0 %v54
    %78 = vmatpush.msra.mxu0 %v53
    %79 = vmatpush.msra.mxu0 %v52
    %80 = vmatpush.msra.mxu0 %v51
    %81 = vmatpush.msra.mxu0 %v50
    %82 = vmatpush.msra.mxu0 %v49
    %83 = vmatpush.msra.mxu0 %v48
    %84 = vmatmul.f32.gmra.mxu0 %v47
    %v85 = vpop.f32.mrf.mxu0
    %v86 = vadd.f32 %v66, %v85
    %87 = vdwg.mxu0
    %v88 = vmax.f32 %v86, 0.0
    %89 = vst [vmem:[#allocation9] sm:$0xff] %v88
    // Predicated region
    $region22: #{tpu_custom_call.1} parent=1 // pred_check
      _
    $region23: #{tpu_custom_call.1} parent=1 // pred_check_branch
      %91 = sbr.rel (0) target = $region25
    $region24: #{tpu_custom_call.1} parent=1 // pred_region
      %93 = vsyncadd [#allocation6], 0
      %s95 = sshll.u32 [#allocation9], 4
      %s96 = int_to_ptr.vmem [resolvable:$true] %s95
      %s97 = sshll.u32 %s4, 4
      %s98 = int_to_ptr.hbm [resolvable:$true] %s97
      %100 = dma.vmem_to_hbm [thread:$0]  %s96, 128, %s98, [#allocation6]
    $region25: #{tpu_custom_call.1} parent=1 // pred_fallthru
      _
    // Predicated region
    $region26: #{tpu_custom_call.1} parent=1 // pred_check
      _
    $region27: #{tpu_custom_call.1} parent=1 // pred_check_branch
      %102 = sbr.rel (0) target = $region29
    $region28: #{tpu_custom_call.1} parent=1 // pred_region
      %104 = dma.done [#allocation6], 128
    $region29: #{tpu_custom_call.1} parent=1 // pred_fallthru
      _
    %105 = vsyncpa [#allocation5], 1
    %106 = vsyncpa [#allocation8], 1
    %107 = vsyncpa [#allocation6], 1

</llo_original>
